<compile_context>
chip_gen: v7x
topology: tpu7x:2x2x1
jax: 0.10.0
libtpu: 0.0.40
codegen_flags: <defaults>
</compile_context>

<pallas_src>
import jax
import jax.numpy as jnp
from jax.experimental import pallas as pl
from jax.experimental.pallas import tpu as pltpu

OBS_DIM = 32
HIDDEN = 128
N_ACTIONS = 16
PAD_A = 128          # lane-dense output slab width
VALUE_LANE = 32      # critic value lives in this lane of the slab
ENV_VERSION = 1

# torch: mask_value = -((2 - 2**-23) * 2**127) == -float32 max.
# Must be a plain Python float: a jnp scalar here is a concrete jax.Array and gets
# captured by the kernel trace ("captures constants" error).
_MASK_VALUE = float(-((2.0 - 2.0 ** (-23)) * 2.0 ** 127))


# --------------------------------------------------------------------------
# Fused kernel: encoder(s) + actor head + masked softmax + critic head.
# --------------------------------------------------------------------------
def _fused_kernel(obs_ref, mask_ref, enc_w_ref, enc_b_ref, head_w_ref, head_b_ref,
                  out_ref):
    # ---- fused actor+critic encoder: one (T,32)x(32,256) bf16 matmul ----
    xb = obs_ref[...].astype(jnp.bfloat16)                           # (T, 32)
    enc = (jnp.dot(xb, enc_w_ref[...], preferred_element_type=jnp.float32)
           + enc_b_ref[...])                                         # (T, 256) f32
    h = jnp.tanh(enc).astype(jnp.bfloat16)                           # (T, 256) bf16

    # ---- fused actor+critic head: one (T,256)x(256,128) bf16 matmul ----
    # lanes 0..15 = actor logits, lane 32 = critic value, all other lanes = 0.
    head = (jnp.dot(h, head_w_ref[...], preferred_element_type=jnp.float32)
            + head_b_ref[...])                                       # (T, 128) f32

    # ---- categorical_masked on the 16 real action lanes (f32, exact) ----
    logits16 = head[:, :N_ACTIONS]                                   # (T, 16)
    keep = mask_ref[...].astype(jnp.int32) != 0                      # (T, 16)
    masked = jnp.where(keep, logits16, _MASK_VALUE)
    m = jnp.max(masked, axis=-1, keepdims=True)
    # masked lanes underflow to exactly 0; if every action is masked the row
    # becomes uniform over the 16 real actions, matching the torch semantics.
    e = jnp.exp(masked - m)
    probs16 = e / jnp.sum(e, axis=-1, keepdims=True)                 # (T, 16)

    # ---- scatter probs into lanes 16..31 of the slab with a 0/1 selector matmul
    # (avoids unaligned lane stores / rolls; `head` is exactly 0 in those lanes).
    row = jax.lax.broadcasted_iota(jnp.int32, (N_ACTIONS, PAD_A), 0)
    col = jax.lax.broadcasted_iota(jnp.int32, (N_ACTIONS, PAD_A), 1)
    sel = (col == row + N_ACTIONS).astype(jnp.float32)               # (16, 128)
    out_ref[...] = head + jnp.dot(probs16, sel,
                                  preferred_element_type=jnp.float32)


# --------------------------------------------------------------------------
# Batched fused wrapper (single pallas_call; weights resident across the grid).
# --------------------------------------------------------------------------
def _round_up(x, m):
    return pl.cdiv(x, m) * m


def _pick_tile(batch):
    """Batch tile: full-dim block for tiny batches, up to 512 rows otherwise,
    split so large batches give >=2 grid steps (2 TensorCores on v7x)."""
    if batch <= 8:
        return batch                      # block dim == full array dim -> legal
    tile = min(512, _round_up(batch, 8))
    if pl.cdiv(batch, tile) < 2 and batch >= 16:
        tile = _round_up(pl.cdiv(batch, 2), 8)
    return tile


@jax.jit
def jit_model_fused_batched(obs_batch, mask_batch, params):
    """obs_batch: (B, OBS_DIM) float, mask_batch: (B, N_ACTIONS) bool/int.
    Returns (logits (B, N_ACTIONS), probs (B, N_ACTIONS), values (B,))."""
    B = obs_batch.shape[0]
    tile = _pick_tile(B)
    grid = (pl.cdiv(B, tile),)

    obs_f = obs_batch.astype(jnp.float32)          # (B, 32) — no row padding
    mask_i = mask_batch.astype(jnp.int8)           # (B, 16) — unpadded, 1 B/elem

    row_spec = lambda shape: pl.BlockSpec(shape, lambda i: (i, 0))
    const_spec = lambda shape: pl.BlockSpec(shape, lambda i: (0, 0))

    out = pl.pallas_call(
        _fused_kernel,
        grid=grid,
        in_specs=[
            row_spec((tile, OBS_DIM)),             # obs
            row_spec((tile, N_ACTIONS)),           # mask (last dim == full dim)
            const_spec((OBS_DIM, 2 * HIDDEN)),     # fused encoder weights (bf16)
            const_spec((1, 2 * HIDDEN)),           # fused encoder bias   (f32)
            const_spec((2 * HIDDEN, PAD_A)),       # fused head weights   (bf16)
            const_spec((1, PAD_A)),                # fused head bias      (f32)
        ],
        out_specs=row_spec((tile, PAD_A)),
        out_shape=jax.ShapeDtypeStruct((B, PAD_A), jnp.float32),
        compiler_params=pltpu.CompilerParams(
            dimension_semantics=("parallel",)),    # batch axis across TCs on v7x
    )(obs_f, mask_i, params["enc_w"], params["enc_b"],
      params["head_w"], params["head_b"])

    logits = out[:, :N_ACTIONS]
    probs = out[:, N_ACTIONS:2 * N_ACTIONS]
    values = out[:, VALUE_LANE]
    return logits, probs, values


# --------------------------------------------------------------------------
# Single-observation API matching the torch JitModel (unsqueeze(dim=0) semantics).
# --------------------------------------------------------------------------
def jit_model_forward(obs, params):
    """JitModel.forward(obs) -> action logits of shape (1, N_ACTIONS)."""
    full_mask = jnp.ones((1, N_ACTIONS), jnp.int8)
    logits, _, _ = jit_model_fused_batched(obs[None, :], full_mask, params)
    return logits


def jit_model_get_value(obs, params):
    """JitModel.get_value(obs) -> scalar value."""
    full_mask = jnp.ones((1, N_ACTIONS), jnp.int8)
    _, _, values = jit_model_fused_batched(obs[None, :], full_mask, params)
    return values[0]


def jit_model_predict(obs, mask, params, deterministic=True, key=None):
    """JitModel.predict(obs, mask, deterministic) -> (action int32, probs)."""
    logits, probs, _ = jit_model_fused_batched(obs[None, :], mask[None, :], params)
    if deterministic:
        action = jnp.argmax(probs, axis=1)
    else:
        # TODO(synk): torch.multinomial has no Pallas primitive; sample with
        # jax.random.categorical from the masked logits outside the kernel.
        masked_logits = jnp.where(mask[None, :].astype(bool), logits, _MASK_VALUE)
        action = jax.random.categorical(key, masked_logits, axis=-1)
    return action.astype(jnp.int32)[0], probs


def jit_model_get_version():
    return ENV_VERSION


# --------------------------------------------------------------------------
# Deterministic parameter init: fused bf16 encoder / head weights.
# --------------------------------------------------------------------------
def init_params(key):
    ks = jax.random.split(key, 8)
    s_in = 1.0 / jnp.sqrt(OBS_DIM)
    s_h = 1.0 / jnp.sqrt(HIDDEN)
    enc_a_w = jax.random.normal(ks[0], (OBS_DIM, HIDDEN), jnp.float32) * s_in
    enc_a_b = jax.random.normal(ks[1], (HIDDEN,), jnp.float32) * 0.01
    actor_w = jax.random.normal(ks[2], (HIDDEN, N_ACTIONS), jnp.float32) * s_h
    actor_b = jax.random.normal(ks[3], (N_ACTIONS,), jnp.float32) * 0.01
    enc_c_w = jax.random.normal(ks[4], (OBS_DIM, HIDDEN), jnp.float32) * s_in
    enc_c_b = jax.random.normal(ks[5], (HIDDEN,), jnp.float32) * 0.01
    critic_w = jax.random.normal(ks[6], (HIDDEN,), jnp.float32) * s_h
    critic_b = jax.random.normal(ks[7], (), jnp.float32) * 0.01

    enc_w = jnp.concatenate([enc_a_w, enc_c_w], axis=1)              # (32, 256)
    enc_b = jnp.concatenate([enc_a_b, enc_c_b])[None, :]             # (1, 256)

    head_w = jnp.zeros((2 * HIDDEN, PAD_A), jnp.float32)
    head_w = head_w.at[:HIDDEN, :N_ACTIONS].set(actor_w)             # actor block
    head_w = head_w.at[HIDDEN:, VALUE_LANE].set(critic_w)            # critic column
    head_b = jnp.zeros((1, PAD_A), jnp.float32)
    head_b = head_b.at[0, :N_ACTIONS].set(actor_b)
    head_b = head_b.at[0, VALUE_LANE].set(critic_b)

    return {
        "enc_w": enc_w.astype(jnp.bfloat16),
        "enc_b": enc_b,
        "head_w": head_w.astype(jnp.bfloat16),
        "head_b": head_b,
    }


# --------------------------------------------------------------------------
# Pure-JAX reference (same bf16-rounded weights/activations) for correctness.
# --------------------------------------------------------------------------
def _reference(obs_batch, mask_batch, params):
    x = obs_batch.astype(jnp.float32).astype(jnp.bfloat16).astype(jnp.float32)
    h = jnp.tanh(x @ params["enc_w"].astype(jnp.float32) + params["enc_b"])
    hb = h.astype(jnp.bfloat16).astype(jnp.float32)
    head = hb @ params["head_w"].astype(jnp.float32) + params["head_b"]
    logits = head[:, :N_ACTIONS]
    values = head[:, VALUE_LANE]
    masked = jnp.where(mask_batch.astype(bool), logits, _MASK_VALUE)
    probs = jax.nn.softmax(masked, axis=-1)
    return logits, probs, values


if __name__ == "__main__":
    key = jax.random.PRNGKey(0)
    pkey, k1, k2 = jax.random.split(key, 3)
    params = init_params(pkey)

    # ---- small batch (single, partial tile) ----
    B = 4
    obs_batch = jax.random.normal(k1, (B, OBS_DIM), jnp.float32)
    mask_row = jnp.array([True] * (N_ACTIONS - 4) + [False] * 4)   # last 4 masked
    mask_batch = jnp.tile(mask_row[None, :], (B, 1))

    logits, probs, values = jit_model_fused_batched(obs_batch, mask_batch, params)
    jax.block_until_ready(probs)
    assert logits.shape == (B, N_ACTIONS)
    assert probs.shape == (B, N_ACTIONS)
    assert values.shape == (B,)
    # masked actions get exactly 0 probability; rows normalize to ~1
    assert float(jnp.max(probs[:, -4:])) < 1e-30
    assert float(jnp.max(jnp.abs(jnp.sum(probs, axis=-1) - 1.0))) < 5e-3

    r_logits, r_probs, r_values = _reference(obs_batch, mask_batch, params)
    assert jnp.allclose(logits, r_logits, rtol=2e-2, atol=1e-3)
    assert jnp.allclose(probs, r_probs, rtol=2e-2, atol=1e-3)
    assert jnp.allclose(values, r_values, rtol=2e-2, atol=1e-3)

    # ---- larger batch: multi-step grid with a partial boundary block ----
    B2 = 300
    obs2 = jax.random.normal(k2, (B2, OBS_DIM), jnp.float32)
    mask2 = jnp.tile(mask_row[None, :], (B2, 1))
    l2, p2, v2 = jit_model_fused_batched(obs2, mask2, params)
    jax.block_until_ready(p2)
    r_l2, r_p2, r_v2 = _reference(obs2, mask2, params)
    assert jnp.allclose(l2, r_l2, rtol=2e-2, atol=1e-3)
    assert jnp.allclose(p2, r_p2, rtol=2e-2, atol=1e-3)
    assert jnp.allclose(v2, r_v2, rtol=2e-2, atol=1e-3)

    # ---- single-obs torch-equivalent API ----
    obs = obs_batch[0]
    single_logits = jit_model_forward(obs, params)
    jax.block_until_ready(single_logits)
    assert single_logits.shape == (1, N_ACTIONS)

    action, p = jit_model_predict(obs, mask_row, params, deterministic=True)
    jax.block_until_ready(p)
    assert p.shape == (1, N_ACTIONS)
    assert 0 <= int(action) < N_ACTIONS - 4     # argmax never picks a masked action

    value = jit_model_get_value(obs, params)
    jax.block_until_ready(value)
    assert bool(jnp.isfinite(value))
    assert jit_model_get_version() == ENV_VERSION

    print("KERNEL_OK")
</pallas_src>

<mosaic_0001>
module attributes {stable_mosaic.version = 11 : i64} {
  func.func @_fused_kernel(%arg0: i32, %arg1: memref<4x32xf32, #tpu.memory_space<vmem>>, %arg2: memref<4x16xi8, #tpu.memory_space<vmem>>, %arg3: memref<32x256xbf16, #tpu.memory_space<vmem>>, %arg4: memref<1x256xf32, #tpu.memory_space<vmem>>, %arg5: memref<256x128xbf16, #tpu.memory_space<vmem>>, %arg6: memref<1x128xf32, #tpu.memory_space<vmem>>, %arg7: memref<4x128xf32, #tpu.memory_space<vmem>>) attributes {dimension_semantics = [#tpu.dimension_semantics<parallel>], iteration_bounds = array<i64: 1>, scalar_prefetch = 0 : i64, scratch_operands = 0 : i64, tpu.core_type = #tpu.core_type<tc>, window_params = [{transform_indices = @transform_0, window_bounds = array<i64: 4, 32>}, {transform_indices = @transform_1, window_bounds = array<i64: 4, 16>}, {pipeline_mode = #tpu.pipeline_mode<synchronous>, transform_indices = @transform_2, window_bounds = array<i64: 32, 256>}, {pipeline_mode = #tpu.pipeline_mode<synchronous>, transform_indices = @transform_3, window_bounds = array<i64: 1, 256>}, {pipeline_mode = #tpu.pipeline_mode<synchronous>, transform_indices = @transform_4, window_bounds = array<i64: 256, 128>}, {pipeline_mode = #tpu.pipeline_mode<synchronous>, transform_indices = @transform_5, window_bounds = array<i64: 1, 128>}, {transform_indices = @transform_6, window_bounds = array<i64: 4, 128>}]} {
    %c0 = arith.constant 0 : index
    %c0_0 = arith.constant 0 : index
    %0 = vector.load %arg1[%c0, %c0_0] : memref<4x32xf32, #tpu.memory_space<vmem>>, vector<4x32xf32>
    %1 = arith.truncf %0 : vector<4x32xf32> to vector<4x32xbf16>
    %c0_1 = arith.constant 0 : index
    %c0_2 = arith.constant 0 : index
    %2 = vector.load %arg3[%c0_1, %c0_2] : memref<32x256xbf16, #tpu.memory_space<vmem>>, vector<32x256xbf16>
    %cst = arith.constant dense<0.000000e+00> : vector<4x256xf32>
    %3 = tpu.matmul %1, %2, %cst {dimension_numbers = #tpu.dot_dimension_numbers<[1], [0], [0], [1], [0, 0, 1, 1], [], []>} : vector<4x32xbf16>, vector<32x256xbf16>, vector<4x256xf32> -> vector<4x256xf32>
    %c0_3 = arith.constant 0 : index
    %c0_4 = arith.constant 0 : index
    %4 = vector.load %arg4[%c0_3, %c0_4] : memref<1x256xf32, #tpu.memory_space<vmem>>, vector<1x256xf32>
    %5 = vector.broadcast %4 : vector<1x256xf32> to vector<4x256xf32>
    %6 = arith.addf %3, %5 : vector<4x256xf32>
    %7 = math.tanh %6 : vector<4x256xf32>
    %8 = arith.truncf %7 : vector<4x256xf32> to vector<4x256xbf16>
    %c0_5 = arith.constant 0 : index
    %c0_6 = arith.constant 0 : index
    %9 = vector.load %arg5[%c0_5, %c0_6] : memref<256x128xbf16, #tpu.memory_space<vmem>>, vector<256x128xbf16>
    %cst_7 = arith.constant dense<0.000000e+00> : vector<4x128xf32>
    %10 = tpu.matmul %8, %9, %cst_7 {dimension_numbers = #tpu.dot_dimension_numbers<[1], [0], [0], [1], [0, 0, 1, 1], [], []>} : vector<4x256xbf16>, vector<256x128xbf16>, vector<4x128xf32> -> vector<4x128xf32>
    %c0_8 = arith.constant 0 : index
    %c0_9 = arith.constant 0 : index
    %11 = vector.load %arg6[%c0_8, %c0_9] : memref<1x128xf32, #tpu.memory_space<vmem>>, vector<1x128xf32>
    %12 = vector.broadcast %11 : vector<1x128xf32> to vector<4x128xf32>
    %13 = arith.addf %10, %12 : vector<4x128xf32>
    %14 = vector.extract_strided_slice %13 {offsets = [0, 0], sizes = [4, 16], strides = [1, 1]} : vector<4x128xf32> to vector<4x16xf32>
    %c0_10 = arith.constant 0 : index
    %c0_11 = arith.constant 0 : index
    %15 = vector.load %arg2[%c0_10, %c0_11] : memref<4x16xi8, #tpu.memory_space<vmem>>, vector<4x16xi8>
    %16 = arith.extsi %15 : vector<4x16xi8> to vector<4x16xi32>
    %c0_i32 = arith.constant 0 : i32
    %17 = vector.broadcast %c0_i32 : i32 to vector<4x16xi32>
    %18 = arith.cmpi ne, %16, %17 : vector<4x16xi32>
    %cst_12 = arith.constant -3.40282347E+38 : f32
    %19 = vector.broadcast %cst_12 : f32 to vector<4x16xf32>
    %20 = arith.select %18, %14, %19 : vector<4x16xi1>, vector<4x16xf32>
    %cst_13 = arith.constant dense<0xFF800000> : vector<4xf32>
    %21 = vector.multi_reduction <maximumf>, %20, %cst_13 [1] : vector<4x16xf32> to vector<4xf32>
    %22 = vector.shape_cast %21 : vector<4xf32> to vector<4x1xf32>
    %23 = vector.broadcast %22 : vector<4x1xf32> to vector<4x16xf32>
    %24 = arith.subf %20, %23 : vector<4x16xf32>
    %25 = math.exp %24 : vector<4x16xf32>
    %cst_14 = arith.constant dense<0.000000e+00> : vector<4xf32>
    %26 = vector.multi_reduction <add>, %25, %cst_14 [1] : vector<4x16xf32> to vector<4xf32>
    %27 = vector.shape_cast %26 : vector<4xf32> to vector<4x1xf32>
    %28 = vector.broadcast %27 : vector<4x1xf32> to vector<4x16xf32>
    %29 = arith.divf %25, %28 : vector<4x16xf32>
    %30 = tpu.iota {dimensions = array<i32: 0>} : vector<16x128xi32>
    %31 = tpu.iota {dimensions = array<i32: 1>} : vector<16x128xi32>
    %c16_i32 = arith.constant 16 : i32
    %32 = vector.broadcast %c16_i32 : i32 to vector<16x128xi32>
    %33 = arith.addi %30, %32 : vector<16x128xi32>
    %34 = arith.cmpi eq, %31, %33 : vector<16x128xi32>
    %35 = arith.extui %34 : vector<16x128xi1> to vector<16x128xi32>
    %36 = arith.sitofp %35 : vector<16x128xi32> to vector<16x128xf32>
    %cst_15 = arith.constant dense<0.000000e+00> : vector<4x128xf32>
    %37 = tpu.matmul %29, %36, %cst_15 {dimension_numbers = #tpu.dot_dimension_numbers<[1], [0], [0], [1], [0, 0, 1, 1], [], []>} : vector<4x16xf32>, vector<16x128xf32>, vector<4x128xf32> -> vector<4x128xf32>
    %38 = arith.addf %13, %37 : vector<4x128xf32>
    %c0_16 = arith.constant 0 : index
    %c0_17 = arith.constant 0 : index
    %39 = vector.load %arg7[%c0_16, %c0_17] : memref<4x128xf32, #tpu.memory_space<vmem>>, vector<4x128xf32>
    tpu.vector_store %arg7[%c0_16, %c0_17], %38 {strides = array<i32>} : memref<4x128xf32, #tpu.memory_space<vmem>>, vector<4x128xf32>,
    return
  }
  func.func @transform_0(%arg0: i32) -> (i32, i32) {
    %c0_i32 = arith.constant 0 : i32
    %c0_i32_0 = arith.constant 0 : i32
    return %arg0, %c0_i32 : i32, i32
  }
  func.func @transform_1(%arg0: i32) -> (i32, i32) {
    %c0_i32 = arith.constant 0 : i32
    %c0_i32_0 = arith.constant 0 : i32
    return %arg0, %c0_i32 : i32, i32
  }
  func.func @transform_2(%arg0: i32) -> (i32, i32) {
    %c0_i32 = arith.constant 0 : i32
    %c0_i32_0 = arith.constant 0 : i32
    %c0_i32_1 = arith.constant 0 : i32
    return %c0_i32, %c0_i32_0 : i32, i32
  }
  func.func @transform_3(%arg0: i32) -> (i32, i32) {
    %c0_i32 = arith.constant 0 : i32
    %c0_i32_0 = arith.constant 0 : i32
    %c0_i32_1 = arith.constant 0 : i32
    return %c0_i32, %c0_i32_0 : i32, i32
  }
  func.func @transform_4(%arg0: i32) -> (i32, i32) {
    %c0_i32 = arith.constant 0 : i32
    %c0_i32_0 = arith.constant 0 : i32
    %c0_i32_1 = arith.constant 0 : i32
    return %c0_i32, %c0_i32_0 : i32, i32
  }
  func.func @transform_5(%arg0: i32) -> (i32, i32) {
    %c0_i32 = arith.constant 0 : i32
    %c0_i32_0 = arith.constant 0 : i32
    %c0_i32_1 = arith.constant 0 : i32
    return %c0_i32, %c0_i32_0 : i32, i32
  }
  func.func @transform_6(%arg0: i32) -> (i32, i32) {
    %c0_i32 = arith.constant 0 : i32
    %c0_i32_0 = arith.constant 0 : i32
    return %arg0, %c0_i32 : i32, i32
  }
}

</mosaic_0001>

<llo_original>
// kernel: jit_model_fused_batched.1
$region0: #{jit_model_fused_batched.1}
  #allocation0 [shape = 'u32[]', space=smem, size = 0x4, offset = 0x4, fixed_abs, tag = 'smem constant byte address 0x4 - core index']
  #allocation1 [shape = 'u32[144,128]{1,0:T(1,128)}', space=vmem, size = 0x12000, scoped, tag = 'internal scratch']
  %s0 = inlined_call_operand.vmem [shape: f32[4,32], index: 0, kind: input, shape index: {}]
  %s1 = inlined_call_operand.vmem [shape: s8[4,16], index: 1, kind: input, shape index: {}]
  %s2 = inlined_call_operand.hbm [shape: bf16[32,256], index: 2, kind: input, shape index: {}]
  %s3 = inlined_call_operand.vmem [shape: f32[1,256], index: 3, kind: input, shape index: {}]
  %s4 = inlined_call_operand.hbm [shape: bf16[256,128], index: 4, kind: input, shape index: {}]
  %s5 = inlined_call_operand.vmem [shape: f32[1,128], index: 5, kind: input, shape index: {}]
  %s6 = inlined_call_operand.vmem [shape: f32[4,128], index: 6, kind: output, shape index: {}]
  %s7 = sld [smem:[#allocation0]]
  $region42: #{jit_model_fused_batched.1} parent=0
    _
  %s9 = ssub.s32 1, %s7
  %s10 = scalar_select 0, %s9, %s7
  $region1: #{jit_model_fused_batched.1} parent=0
    #allocation2 [shape = 'u8[16384]{0}', space=vmem, size = 0x4000, scoped, tag = 'input window, operand 2, single buffered']
    #allocation3 [shape = 's32[1]{0}', space=sflag, size = 0x4, scoped, tag = 'scoped memory for jit_model_fused_batched.1']
    #allocation4 [shape = 'u8[65536]{0}', space=vmem, size = 0x10000, scoped, tag = 'input window, operand 4, single buffered']
    #allocation5 [shape = 's32[1]{0}', space=sflag, size = 0x4, scoped, tag = 'scoped memory for jit_model_fused_batched.1']
    %11 = vsyncpa [#allocation3], 0
    %12 = vsyncpa [#allocation5], 0
    // Predicated region
    $region2: #{jit_model_fused_batched.1} parent=1 // pred_check
      _
    $region3: #{jit_model_fused_batched.1} parent=1 // pred_check_branch
      %14 = sbr.rel (0) target = $region5
    $region4: #{jit_model_fused_batched.1} parent=1 // pred_region
      _
    $region5: #{jit_model_fused_batched.1} parent=1 // pred_fallthru
      _
    // Predicated region
    $region6: #{jit_model_fused_batched.1} parent=1 // pred_check
      _
    $region7: #{jit_model_fused_batched.1} parent=1 // pred_check_branch
      %16 = sbr.rel (0) target = $region9
    $region8: #{jit_model_fused_batched.1} parent=1 // pred_region
      _
    $region9: #{jit_model_fused_batched.1} parent=1 // pred_fallthru
      _
    // Predicated region
    $region10: #{jit_model_fused_batched.1} parent=1 // pred_check
      _
    $region11: #{jit_model_fused_batched.1} parent=1 // pred_check_branch
      %18 = sbr.rel (0) target = $region13
    $region12: #{jit_model_fused_batched.1} parent=1 // pred_region
      %s20 = ssub.s32 512, 512
      %21 = vsyncadd [#allocation3], %s20
      %s22 = sshll.u32 [#allocation2], 4
      %s23 = int_to_ptr.vmem [resolvable:$true] %s22
      %28 = dma.hbm_to_vmem [thread:$0]  %s2, 512, %s23, [#allocation3], 128, 128, 8
    $region13: #{jit_model_fused_batched.1} parent=1 // pred_fallthru
      _
    // Predicated region
    $region14: #{jit_model_fused_batched.1} parent=1 // pred_check
      _
    $region15: #{jit_model_fused_batched.1} parent=1 // pred_check_branch
      %30 = sbr.rel (0) target = $region17
    $region16: #{jit_model_fused_batched.1} parent=1 // pred_region
      _
    $region17: #{jit_model_fused_batched.1} parent=1 // pred_fallthru
      _
    // Predicated region
    $region18: #{jit_model_fused_batched.1} parent=1 // pred_check
      _
    $region19: #{jit_model_fused_batched.1} parent=1 // pred_check_branch
      %32 = sbr.rel (0) target = $region21
    $region20: #{jit_model_fused_batched.1} parent=1 // pred_region
      %s34 = ssub.s32 2048, 2048
      %35 = vsyncadd [#allocation5], %s34
      %s36 = sshll.u32 [#allocation4], 4
      %s37 = int_to_ptr.vmem [resolvable:$true] %s36
      %42 = dma.hbm_to_vmem [thread:$0]  %s4, 2048, %s37, [#allocation5], 64, 64, 4
    $region21: #{jit_model_fused_batched.1} parent=1 // pred_fallthru
      _
    // Predicated region
    $region22: #{jit_model_fused_batched.1} parent=1 // pred_check
      _
    $region23: #{jit_model_fused_batched.1} parent=1 // pred_check_branch
      %44 = sbr.rel (0) target = $region25
    $region24: #{jit_model_fused_batched.1} parent=1 // pred_region
      _
    $region25: #{jit_model_fused_batched.1} parent=1 // pred_fallthru
      _
    // Predicated region
    $region26: #{jit_model_fused_batched.1} parent=1 // pred_check
      _
    $region27: #{jit_model_fused_batched.1} parent=1 // pred_check_branch
      %46 = sbr.rel (0) target = $region29
    $region28: #{jit_model_fused_batched.1} parent=1 // pred_region
      %47 = dma.done [#allocation3], 512
    $region29: #{jit_model_fused_batched.1} parent=1 // pred_fallthru
      _
    // Predicated region
    $region30: #{jit_model_fused_batched.1} parent=1 // pred_check
      _
    $region31: #{jit_model_fused_batched.1} parent=1 // pred_check_branch
      %49 = sbr.rel (0) target = $region33
    $region32: #{jit_model_fused_batched.1} parent=1 // pred_region
      %50 = dma.done [#allocation5], 2048
    $region33: #{jit_model_fused_batched.1} parent=1 // pred_fallthru
      _
    %v52 = vld [vmem:[%s0] sm:$0xf]
    %v53 = vpack.c.bf16 %v52, %v52
    %v54 = vld [vmem:[#allocation2] sm:$0xff]
    %v55 = vld [vmem:[#allocation2 + $0x8] sm:$0xff]
    %v56 = vld [vmem:[#allocation2 + $0x10] sm:$0xff]
    %v57 = vld [vmem:[#allocation2 + $0x18] sm:$0xff]
    %v58 = vld [vmem:[%s3] sm:$0x3]
    %v60 = vlaneseq
    %v61 = vshrl.u32 %v60, 7
    %v62 = vsub.s32 0, %v61
    %v63 = vrot.slane %v58, %v62
    %v64 = vlaneseq
    %v65 = vshrl.u32 %v64, 7
    %v66 = vsub.s32 1, %v65
    %v67 = vrot.slane %v58, %v66
    %v74 = vunpack.c.l.b16 %v54
    %v75 = vunpack.c.h.b16 %v54
    %v76 = vunpack.c.l.b16 %v55
    %v77 = vunpack.c.h.b16 %v55
    %v78 = vunpack.c.l.b16 %v56
    %v79 = vunpack.c.h.b16 %v56
    %v80 = vunpack.c.l.b16 %v57
    %v81 = vunpack.c.h.b16 %v57
    %v82 = vpack.c.b16 %v76, %v74
    %v83 = vpack.c.b16 %v77, %v75
    %v84 = vpack.c.b16 %v80, %v78
    %v85 = vpack.c.b16 %v81, %v79
    %vm90 = vcmask 261120
    %v92 = vsel %vm90, %v53, 0
    %94 = vmatprep.subr.bf16.mxu0 %v83
    %95 = vmatpush1.bf16.msra.mxu0 %v82
    %96 = vmatprep.subr.bf16.mxu0 %v85
    %97 = vmatpush1.bf16.msra.mxu0 %v84
    %98 = vmatprep.subr.bf16.mxu0 0
    %99 = vmatpush1.bf16.msra.mxu0 0
    %100 = vmatprep.subr.bf16.mxu0 0
    %101 = vmatpush1.bf16.msra.mxu0 0
    %102 = vmatprep.subr.bf16.mxu0 0
    %103 = vmatpush1.bf16.msra.mxu0 0
    %104 = vmatprep.subr.bf16.mxu0 0
    %105 = vmatpush1.bf16.msra.mxu0 0
    %106 = vmatprep.subr.bf16.mxu0 0
    %107 = vmatpush1.bf16.msra.mxu0 0
    %108 = vmatprep.subr.bf16.mxu0 0
    %109 = vmatpush1.bf16.msra.mxu0 0
    %110 = vmatprep.subr.bf16.mxu0 0
    %111 = vmatpush1.bf16.msra.mxu0 0
    %112 = vmatprep.subr.bf16.mxu0 0
    %113 = vmatpush1.bf16.msra.mxu0 0
    %114 = vmatprep.subr.bf16.mxu0 0
    %115 = vmatpush1.bf16.msra.mxu0 0
    %116 = vmatprep.subr.bf16.mxu0 0
    %117 = vmatpush1.bf16.msra.mxu0 0
    %118 = vmatprep.subr.bf16.mxu0 0
    %119 = vmatpush1.bf16.msra.mxu0 0
    %120 = vmatprep.subr.bf16.mxu0 0
    %121 = vmatpush1.bf16.msra.mxu0 0
    %122 = vmatprep.subr.bf16.mxu0 0
    %123 = vmatpush1.bf16.msra.mxu0 0
    %124 = vmatprep.subr.bf16.mxu0 0
    %125 = vmatpush1.bf16.msra.mxu0 0
    %126 = vmatprep.mubr.bf16.mxu0 0
    %127 = vmatmul.mubr.bf16.gmra.mrb[0].mxu0 %v92
    %v128 = vpop.f32.mrb[0].mxu0
    %v129 = vadd.f32 %v63, %v128
    %v130 = vpop.f32.mrb[0].mxu0
    %v131 = vadd.f32 %v67, %v130
    %v132 = vpop.f32.mrb[0].mxu0
    %v133 = vpop.f32.mrb[0].mxu0
    %134 = vdwg.mxu0
    %v135 = vtanh.pop %v129
    %v136 = vtanh.pop %v131
    %v137 = vpack.c.bf16 %v135, %v135
    %v138 = vpack.c.bf16 %v136, %v136
    %v139 = vld [vmem:[#allocation4] sm:$0xf]
    %v140 = vld [vmem:[#allocation4 + $0x4] sm:$0xf]
    %v141 = vld [vmem:[#allocation4 + $0x8] sm:$0xf]
    %v142 = vld [vmem:[#allocation4 + $0xc] sm:$0xf]
    %v143 = vld [vmem:[#allocation4 + $0x10] sm:$0xf]
    %v144 = vld [vmem:[#allocation4 + $0x14] sm:$0xf]
    %v145 = vld [vmem:[#allocation4 + $0x18] sm:$0xf]
    %v146 = vld [vmem:[#allocation4 + $0x1c] sm:$0xf]
    %v147 = vld [vmem:[#allocation4 + $0x20] sm:$0xf]
    %v148 = vld [vmem:[#allocation4 + $0x24] sm:$0xf]
    %v149 = vld [vmem:[#allocation4 + $0x28] sm:$0xf]
    %v150 = vld [vmem:[#allocation4 + $0x2c] sm:$0xf]
    %v151 = vld [vmem:[#allocation4 + $0x30] sm:$0xf]
    %v152 = vld [vmem:[#allocation4 + $0x34] sm:$0xf]
    %v153 = vld [vmem:[#allocation4 + $0x38] sm:$0xf]
    %v154 = vld [vmem:[#allocation4 + $0x3c] sm:$0xf]
    %v155 = vld [vmem:[#allocation4 + $0x40] sm:$0xf]
    %v156 = vld [vmem:[#allocation4 + $0x44] sm:$0xf]
    %v157 = vld [vmem:[#allocation4 + $0x48] sm:$0xf]
    %v158 = vld [vmem:[#allocation4 + $0x4c] sm:$0xf]
    %v159 = vld [vmem:[#allocation4 + $0x50] sm:$0xf]
    %v160 = vld [vmem:[#allocation4 + $0x54] sm:$0xf]
    %v161 = vld [vmem:[#allocation4 + $0x58] sm:$0xf]
    %v162 = vld [vmem:[#allocation4 + $0x5c] sm:$0xf]
    %v163 = vld [vmem:[#allocation4 + $0x60] sm:$0xf]
    %v164 = vld [vmem:[#allocation4 + $0x64] sm:$0xf]
    %v165 = vld [vmem:[#allocation4 + $0x68] sm:$0xf]
    %v166 = vld [vmem:[#allocation4 + $0x6c] sm:$0xf]
    %v167 = vld [vmem:[#allocation4 + $0x70] sm:$0xf]
    %v168 = vld [vmem:[#allocation4 + $0x74] sm:$0xf]
    %v169 = vld [vmem:[#allocation4 + $0x78] sm:$0xf]
    %v170 = vld [vmem:[#allocation4 + $0x7c] sm:$0xf]
    %v171 = vld [vmem:[%s5] sm:$0x1]
    %v173 = vlaneseq
    %v174 = vshrl.u32 %v173, 7
    %v175 = vsub.s32 0, %v174
    %v176 = vrot.slane %v171, %v175
    %v210 = vunpack.c.l.b16 %v139
    %v211 = vunpack.c.l.b16 %v140
    %v212 = vunpack.c.l.b16 %v141
    %v213 = vunpack.c.l.b16 %v142
    %v214 = vunpack.c.l.b16 %v143
    %v215 = vunpack.c.l.b16 %v144
    %v216 = vunpack.c.l.b16 %v145
    %v217 = vunpack.c.l.b16 %v146
    %v218 = vunpack.c.l.b16 %v147
    %v219 = vunpack.c.l.b16 %v148
    %v220 = vunpack.c.l.b16 %v149
    %v221 = vunpack.c.l.b16 %v150
    %v222 = vunpack.c.l.b16 %v151
    %v223 = vunpack.c.l.b16 %v152
    %v224 = vunpack.c.l.b16 %v153
    %v225 = vunpack.c.l.b16 %v154
    %v226 = vunpack.c.l.b16 %v155
    %v227 = vunpack.c.l.b16 %v156
    %v228 = vunpack.c.l.b16 %v157
    %v229 = vunpack.c.l.b16 %v158
    %v230 = vunpack.c.l.b16 %v159
    %v231 = vunpack.c.l.b16 %v160
    %v232 = vunpack.c.l.b16 %v161
    %v233 = vunpack.c.l.b16 %v162
    %v234 = vunpack.c.l.b16 %v163
    %v235 = vunpack.c.l.b16 %v164
    %v236 = vunpack.c.l.b16 %v165
    %v237 = vunpack.c.l.b16 %v166
    %v238 = vunpack.c.l.b16 %v167
    %v239 = vunpack.c.l.b16 %v168
    %v240 = vunpack.c.l.b16 %v169
    %v241 = vunpack.c.l.b16 %v170
    %v242 = vpack.c.b16 %v211, %v210
    %v243 = vpack.c.b16 %v213, %v212
    %v244 = vpack.c.b16 %v215, %v214
    %v245 = vpack.c.b16 %v217, %v216
    %v246 = vpack.c.b16 %v219, %v218
    %v247 = vpack.c.b16 %v221, %v220
    %v248 = vpack.c.b16 %v223, %v222
    %v249 = vpack.c.b16 %v225, %v224
    %v250 = vpack.c.b16 %v227, %v226
    %v251 = vpack.c.b16 %v229, %v228
    %v252 = vpack.c.b16 %v231, %v230
    %v253 = vpack.c.b16 %v233, %v232
    %v254 = vpack.c.b16 %v235, %v234
    %v255 = vpack.c.b16 %v237, %v236
    %v256 = vpack.c.b16 %v239, %v238
    %v257 = vpack.c.b16 %v241, %v240
    %274 = vmatprep.subr.bf16.mxu0 0
    %275 = vmatpush1.bf16.msra.mxu0 %v242
    %276 = vmatprep.subr.bf16.mxu0 0
    %277 = vmatpush1.bf16.msra.mxu0 %v243
    %278 = vmatprep.subr.bf16.mxu0 0
    %279 = vmatpush1.bf16.msra.mxu0 %v244
    %280 = vmatprep.subr.bf16.mxu0 0
    %281 = vmatpush1.bf16.msra.mxu0 %v245
    %282 = vmatprep.subr.bf16.mxu0 0
    %283 = vmatpush1.bf16.msra.mxu0 %v246
    %284 = vmatprep.subr.bf16.mxu0 0
    %285 = vmatpush1.bf16.msra.mxu0 %v247
    %286 = vmatprep.subr.bf16.mxu0 0
    %287 = vmatpush1.bf16.msra.mxu0 %v248
    %288 = vmatprep.subr.bf16.mxu0 0
    %289 = vmatpush1.bf16.msra.mxu0 %v249
    %290 = vmatprep.subr.bf16.mxu0 0
    %291 = vmatpush1.bf16.msra.mxu0 %v250
    %292 = vmatprep.subr.bf16.mxu0 0
    %293 = vmatpush1.bf16.msra.mxu0 %v251
    %294 = vmatprep.subr.bf16.mxu0 0
    %295 = vmatpush1.bf16.msra.mxu0 %v252
    %296 = vmatprep.subr.bf16.mxu0 0
    %297 = vmatpush1.bf16.msra.mxu0 %v253
    %298 = vmatprep.subr.bf16.mxu0 0
    %299 = vmatpush1.bf16.msra.mxu0 %v254
    %300 = vmatprep.subr.bf16.mxu0 0
    %301 = vmatpush1.bf16.msra.mxu0 %v255
    %302 = vmatprep.subr.bf16.mxu0 0
    %303 = vmatpush1.bf16.msra.mxu0 %v256
    %304 = vmatprep.subr.bf16.mxu0 0
    %305 = vmatpush1.bf16.msra.mxu0 %v257
    %306 = vmatprep.mubr.bf16.mxu0 %v138
    %307 = vmatmul.mubr.bf16.gmra.mrb[0].mxu0 %v137
    %v308 = vpop.f32.mrb[0].mxu0
    %v309 = vadd.f32 %v176, %v308
    %v310 = vpop.f32.mrb[0].mxu0
    %v311 = vpop.f32.mrb[0].mxu0
    %v312 = vpop.f32.mrb[0].mxu0
    %313 = vdwg.mxu0
    %v314 = vld [vmem:[%s1] sm:$0x1]
    %v315 = vunpack.c.0.s8 %v314
    %vm316 = vcmp.ne.s32.totalorder %v315, 0
    %v317 = vsel %vm316, %v309, -3.4028235e+38
    %vm318 = vcmask 125952
    %v319 = vsel %vm318, %v317, -inf
    %320 = vmax.xlane.f32.xlu0 %v319
    %v321 = vpop.xlane.xlu0 %320
    %v322 = vsub.f32 %v317, %v321
    %v323 = vmul.f32 %v322, 1.442695
    %v324 = vpow.pop %v323
    %v325 = vsel %vm318, %v324, 0.0
    %326 = vadd.xlane.f32.xlu0 %v325
    %v327 = vpop.xlane.xlu0 %326
    %v328 = vrcp.pop %v327
    %v329 = vmul.f32 %v324, %v328
    %v330 = vlaneseq
    %v331 = vshrl.u32 %v330, 7
    %v332 = vadd.s32 %v331, 8
    %v333 = vlaneseq
    %v334 = vand.u32 %v333, 127
    %v335 = vadd.s32 %v331, 16
    %v336 = vadd.s32 %v332, 16
    %vm337 = vcmp.eq.s32.totalorder %v334, %v335
    %vm338 = vcmp.eq.s32.totalorder %v334, %v336
    %v339 = vsel %vm337, 1, 0
    %v340 = vsel %vm338, 1, 0
    %v341 = vcvt.s32.f32 %v339
    %v342 = vcvt.s32.f32 %v340
    %vm343 = vcmask 130048
    %v345 = vsel %vm343, %v329, 0
    %347 = vmatprep.subr.mxu0 0.0
    %348 = vmatpush1.msra.mxu0 %v341
    %349 = vmatprep.subr.mxu0 0.0
    %350 = vmatpush1.msra.mxu0 %v342
    %351 = vmatprep.subr.mxu0 0.0
    %352 = vmatpush1.msra.mxu0 0.0
    %353 = vmatprep.subr.mxu0 0.0
    %354 = vmatpush1.msra.mxu0 0.0
    %355 = vmatprep.subr.mxu0 0.0
    %356 = vmatpush1.msra.mxu0 0.0
    %357 = vmatprep.subr.mxu0 0.0
    %358 = vmatpush1.msra.mxu0 0.0
    %359 = vmatprep.subr.mxu0 0.0
    %360 = vmatpush1.msra.mxu0 0.0
    %361 = vmatprep.subr.mxu0 0.0
    %362 = vmatpush1.msra.mxu0 0.0
    %363 = vmatprep.subr.mxu0 0.0
    %364 = vmatpush1.msra.mxu0 0.0
    %365 = vmatprep.subr.mxu0 0.0
    %366 = vmatpush1.msra.mxu0 0.0
    %367 = vmatprep.subr.mxu0 0.0
    %368 = vmatpush1.msra.mxu0 0.0
    %369 = vmatprep.subr.mxu0 0.0
    %370 = vmatpush1.msra.mxu0 0.0
    %371 = vmatprep.subr.mxu0 0.0
    %372 = vmatpush1.msra.mxu0 0.0
    %373 = vmatprep.subr.mxu0 0.0
    %374 = vmatpush1.msra.mxu0 0.0
    %375 = vmatprep.subr.mxu0 0.0
    %376 = vmatpush1.msra.mxu0 0.0
    %377 = vmatprep.subr.mxu0 0.0
    %378 = vmatpush1.msra.mxu0 0.0
    %379 = vmatprep.subr.mxu0 0.0
    %380 = vmatpush1.msra.mxu0 0.0
    %381 = vmatprep.subr.mxu0 0.0
    %382 = vmatpush1.msra.mxu0 0.0
    %383 = vmatprep.subr.mxu0 0.0
    %384 = vmatpush1.msra.mxu0 0.0
    %385 = vmatprep.subr.mxu0 0.0
    %386 = vmatpush1.msra.mxu0 0.0
    %387 = vmatprep.subr.mxu0 0.0
    %388 = vmatpush1.msra.mxu0 0.0
    %389 = vmatprep.subr.mxu0 0.0
    %390 = vmatpush1.msra.mxu0 0.0
    %391 = vmatprep.subr.mxu0 0.0
    %392 = vmatpush1.msra.mxu0 0.0
    %393 = vmatprep.subr.mxu0 0.0
    %394 = vmatpush1.msra.mxu0 0.0
    %395 = vmatprep.subr.mxu0 0.0
    %396 = vmatpush1.msra.mxu0 0.0
    %397 = vmatprep.subr.mxu0 0.0
    %398 = vmatpush1.msra.mxu0 0.0
    %399 = vmatprep.subr.mxu0 0.0
    %400 = vmatpush1.msra.mxu0 0.0
    %401 = vmatprep.subr.mxu0 0.0
    %402 = vmatpush1.msra.mxu0 0.0
    %403 = vmatprep.subr.mxu0 0.0
    %404 = vmatpush1.msra.mxu0 0.0
    %405 = vmatprep.subr.mxu0 0.0
    %406 = vmatpush1.msra.mxu0 0.0
    %407 = vmatprep.subr.mxu0 0.0
    %408 = vmatpush1.msra.mxu0 0.0
    %409 = vmatprep.subr.mxu0 0.0
    %410 = vmatpush1.msra.mxu0 0.0
    %411 = vmatprep.mubr.f32.mxu0 0.0
    %412 = vmatmul.mubr.f32.gmra.mrb[0].mxu0 %v345
    %v413 = vpop.f32.mrb[0].mxu0
    %v414 = vadd.f32 0.0, %v413
    %v415 = vpop.f32.mrb[0].mxu0
    %416 = vdwg.mxu0
    %v417 = vadd.f32 %v309, %v414
    %418 = vst [vmem:[%s6] sm:$0xf] %v417
    // Predicated region
    $region34: #{jit_model_fused_batched.1} parent=1 // pred_check
      _
    $region35: #{jit_model_fused_batched.1} parent=1 // pred_check_branch
      %420 = sbr.rel (0) target = $region37
    $region36: #{jit_model_fused_batched.1} parent=1 // pred_region
      _
    $region37: #{jit_model_fused_batched.1} parent=1 // pred_fallthru
      _
    // Predicated region
    $region38: #{jit_model_fused_batched.1} parent=1 // pred_check
      _
    $region39: #{jit_model_fused_batched.1} parent=1 // pred_check_branch
      %422 = sbr.rel (0) target = $region41
    $region40: #{jit_model_fused_batched.1} parent=1 // pred_region
      _
    $region41: #{jit_model_fused_batched.1} parent=1 // pred_fallthru
      _
    %423 = vsyncpa [#allocation3], 1
    %424 = vsyncpa [#allocation5], 1

</llo_original>
